<compile_context>
chip_gen: v5e
topology: v5e:2x2
jax: 0.10.0
libtpu: 0.0.40
codegen_flags: <defaults>
</compile_context>

<pallas_src>
from math import comb
from itertools import combinations

import numpy as np
import jax
import jax.numpy as jnp
from jax.experimental import pallas as pl
from jax.experimental.pallas import tpu as pltpu

MAX_ROW_TILE = 1024     # 1024 x 128 x f32 = 512 KiB/buffer; safe under scoped VMEM on v5e/v6e/v7x
TARGET_GRID_STEPS = 4   # keep >= 2x TensorCores worth of grid steps (v7x has 2 TCs/chip)


def build_rotation_matrix(rots, ndim):
    """Pure-JAX equivalent of get_mat(); returns the real (ndim, ndim) matrix mat.T."""
    pairs = np.array(list(combinations(range(ndim), 2)), dtype=np.int32)  # (P, 2)
    i_idx = jnp.asarray(pairs[:, 0])
    j_idx = jnp.asarray(pairs[:, 1])
    cos_t = jnp.cos(rots.astype(jnp.float32))
    sin_t = jnp.sin(rots.astype(jnp.float32))
    eye = jnp.eye(ndim, dtype=jnp.float32)
    ei = eye[i_idx]  # (P, ndim) one-hot rows
    ej = eye[j_idx]
    # P_k = I + (cosθ-1)(e_i e_i^T + e_j e_j^T) - sinθ e_i e_j^T + sinθ e_j e_i^T
    P = (eye[None, :, :]
         + (cos_t - 1.0)[:, None, None] * (ei[:, :, None] * ei[:, None, :]
                                           + ej[:, :, None] * ej[:, None, :])
         - sin_t[:, None, None] * (ei[:, :, None] * ej[:, None, :])
         + sin_t[:, None, None] * (ej[:, :, None] * ei[:, None, :]))

    def step(mat, Pk):
        return Pk @ mat, None

    mat, _ = jax.lax.scan(step, eye, P)   # mat = P_last @ ... @ P_first
    return mat.T                          # matches get_mat(); imaginary part is 0


def _rot_apply_kernel(x_ref, w_ref, o_ref):
    # Hot path: one lane-dense (row_tile, lanes) @ (lanes, lanes) MXU matmul.
    # The weight is block-diagonal kron(I_rep, W); real & imag rows are fused.
    o_ref[...] = jnp.dot(x_ref[...], w_ref[...],
                         preferred_element_type=jnp.float32)


def _pick_lanes(ndim):
    """Smallest replication `rep` so that rep*ndim is a multiple of 128 (lane dense)."""
    for rep in range(1, 129):
        lanes = rep * ndim
        if lanes % 128 == 0:
            return rep, lanes
        if lanes > 1024:
            break
    return 1, ndim   # fallback: still correct (block last dim == full dim), just not lane-dense


def _pick_row_tile(rows):
    """Large, sublane-aligned row tiles; aim for a few grid steps for TC sharding."""
    if rows <= 8:
        return max(rows, 1)                      # full-dim block (legal per tiling rule)
    tile = pl.cdiv(rows, TARGET_GRID_STEPS)
    tile = ((tile + 7) // 8) * 8                 # sublane align
    return max(8, min(tile, MAX_ROW_TILE))


def plane_rotations_forward(x, rots, ndim):
    """x: complex array of shape (..., ndim). Returns complex64 of the same shape."""
    orig_shape = x.shape
    assert orig_shape[-1] == ndim
    x = x.astype(jnp.complex64)
    if x.size == 0:
        return x

    w = build_rotation_matrix(rots, ndim)                    # (ndim, ndim) float32
    rep, lanes = _pick_lanes(ndim)
    wk = jnp.kron(jnp.eye(rep, dtype=jnp.float32), w)        # (lanes, lanes) block-diagonal

    # Fuse real/imag planes into a single float buffer (W is real: planes don't mix).
    n_vec = x.size // ndim                                   # number of complex ndim-vectors
    xr = jnp.real(x).reshape(n_vec, ndim)
    xi = jnp.imag(x).reshape(n_vec, ndim)
    flat = jnp.concatenate([xr, xi], axis=0).reshape(-1)     # (2 * n_vec * ndim,)
    total = flat.shape[0]

    # Lane-dense repack: (rows_l, lanes) with lanes a multiple of 128 (ndim=16 -> 128).
    rows_l = pl.cdiv(total, lanes)
    tail = rows_l * lanes - total
    if tail:
        flat = jnp.concatenate([flat, jnp.zeros((tail,), jnp.float32)])
    x2d = flat.reshape(rows_l, lanes)

    row_tile = _pick_row_tile(rows_l)
    grid_rows = pl.cdiv(rows_l, row_tile)

    out2d = pl.pallas_call(
        _rot_apply_kernel,
        out_shape=jax.ShapeDtypeStruct((rows_l, lanes), jnp.float32),
        grid_spec=pltpu.PrefetchScalarGridSpec(
            num_scalar_prefetch=0,
            grid=(grid_rows,),
            in_specs=[
                pl.BlockSpec((row_tile, lanes), lambda r: (r, 0)),  # fused/lane-dense data
                pl.BlockSpec((lanes, lanes), lambda r: (0, 0)),     # resident block-diag weight
            ],
            out_specs=pl.BlockSpec((row_tile, lanes), lambda r: (r, 0)),
        ),
        compiler_params=pltpu.CompilerParams(
            dimension_semantics=("parallel",)),
    )(x2d, wk)

    # Undo the repack and recombine the complex planes.
    y = out2d.reshape(-1)[:total].reshape(2 * n_vec, ndim)
    out = jax.lax.complex(y[:n_vec], y[n_vec:]).reshape(orig_shape)
    return out


if __name__ == "__main__":
    ndim = 16                      # rotated dimension
    batch, seq = 2, 8              # leading dims of x
    n_rots = comb(ndim, 2)         # 120

    key = jax.random.PRNGKey(0)
    k_rots, k_xr, k_xi = jax.random.split(key, 3)

    # deterministic "parameter" init: normal(0, 1), shape (comb(ndim, 2),)
    rots = jax.random.normal(k_rots, (n_rots,), dtype=jnp.float32)

    # complex input x of shape (batch, seq, ndim)
    x = (jax.random.normal(k_xr, (batch, seq, ndim), dtype=jnp.float32)
         + 1j * jax.random.normal(k_xi, (batch, seq, ndim), dtype=jnp.float32)
         ).astype(jnp.complex64)

    out = plane_rotations_forward(x, rots, ndim)
    out = jax.block_until_ready(out)

    # pure-JAX reference (same math, no Pallas) for a sanity check
    w_ref = build_rotation_matrix(rots, ndim).astype(jnp.complex64)
    ref = x @ w_ref
    np.testing.assert_allclose(np.asarray(out), np.asarray(ref), rtol=1e-5, atol=1e-5)

    assert out.shape == x.shape and out.dtype == jnp.complex64
    print("KERNEL_OK")
</pallas_src>

<mosaic_0001>
module attributes {stable_mosaic.version = 11 : i64} {
  func.func @_rot_apply_kernel(%arg0: i32, %arg1: memref<4x128xf32, #tpu.memory_space<vmem>>, %arg2: memref<128x128xf32, #tpu.memory_space<vmem>>, %arg3: memref<4x128xf32, #tpu.memory_space<vmem>>) attributes {dimension_semantics = [#tpu.dimension_semantics<parallel>], iteration_bounds = array<i64: 1>, scalar_prefetch = 0 : i64, scratch_operands = 0 : i64, tpu.core_type = #tpu.core_type<tc>, window_params = [{transform_indices = @transform_0, window_bounds = array<i64: 4, 128>}, {pipeline_mode = #tpu.pipeline_mode<synchronous>, transform_indices = @transform_1, window_bounds = array<i64: 128, 128>}, {transform_indices = @transform_2, window_bounds = array<i64: 4, 128>}]} {
    %c0 = arith.constant 0 : index
    %c0_0 = arith.constant 0 : index
    %0 = vector.load %arg1[%c0, %c0_0] : memref<4x128xf32, #tpu.memory_space<vmem>>, vector<4x128xf32>
    %c0_1 = arith.constant 0 : index
    %c0_2 = arith.constant 0 : index
    %1 = vector.load %arg2[%c0_1, %c0_2] : memref<128x128xf32, #tpu.memory_space<vmem>>, vector<128x128xf32>
    %cst = arith.constant dense<0.000000e+00> : vector<4x128xf32>
    %2 = tpu.matmul %0, %1, %cst {dimension_numbers = #tpu.dot_dimension_numbers<[1], [0], [0], [1], [0, 0, 1, 1], [], []>} : vector<4x128xf32>, vector<128x128xf32>, vector<4x128xf32> -> vector<4x128xf32>
    %c0_3 = arith.constant 0 : index
    %c0_4 = arith.constant 0 : index
    %3 = vector.load %arg3[%c0_3, %c0_4] : memref<4x128xf32, #tpu.memory_space<vmem>>, vector<4x128xf32>
    tpu.vector_store %arg3[%c0_3, %c0_4], %2 {strides = array<i32>} : memref<4x128xf32, #tpu.memory_space<vmem>>, vector<4x128xf32>,
    return
  }
  func.func @transform_0(%arg0: i32) -> (i32, i32) {
    %c0_i32 = arith.constant 0 : i32
    %c0_i32_0 = arith.constant 0 : i32
    return %arg0, %c0_i32 : i32, i32
  }
  func.func @transform_1(%arg0: i32) -> (i32, i32) {
    %c0_i32 = arith.constant 0 : i32
    %c0_i32_0 = arith.constant 0 : i32
    %c0_i32_1 = arith.constant 0 : i32
    return %c0_i32, %c0_i32_0 : i32, i32
  }
  func.func @transform_2(%arg0: i32) -> (i32, i32) {
    %c0_i32 = arith.constant 0 : i32
    %c0_i32_0 = arith.constant 0 : i32
    return %arg0, %c0_i32 : i32, i32
  }
}

</mosaic_0001>

<llo_original>
// kernel: tpu_custom_call.1
$region0: #{tpu_custom_call.1}
  #allocation0 [shape = 'u32[]', space=smem, size = 0x4, offset = 0x4, fixed_abs, tag = 'smem constant byte address 0x4 - core index']
  #allocation1 [shape = 'u32[72,128]{1,0:T(1,128)}', space=vmem, size = 0x9000, scoped, tag = 'internal scratch']
  %s0 = inlined_call_operand.hbm [shape: f32[4,128], index: 0, kind: input, shape index: {}]
  %s1 = inlined_call_operand.hbm [shape: f32[128,128], index: 1, kind: input, shape index: {}]
  %s2 = inlined_call_operand.hbm [shape: f32[4,128], index: 2, kind: output, shape index: {}]
  %s3 = sld [smem:[#allocation0]]
  $region26: #{tpu_custom_call.1} parent=0
    _
  %s5 = ssub.s32 1, %s3
  %s6 = scalar_select 0, %s5, %s3
  $region1: #{tpu_custom_call.1} parent=0
    #allocation2 [shape = 'u8[2048]{0}', space=vmem, size = 0x800, scoped, tag = 'input window, operand 0, single buffered']
    #allocation3 [shape = 's32[1]{0}', space=sflag, size = 0x4, scoped, tag = 'scoped memory for tpu_custom_call.1']
    #allocation4 [shape = 's32[1]{0}', space=sflag, size = 0x4, scoped, tag = 'scoped memory for tpu_custom_call.1']
    #allocation5 [shape = 'u8[65536]{0}', space=vmem, size = 0x10000, scoped, tag = 'input window, operand 1, single buffered']
    #allocation6 [shape = 's32[1]{0}', space=sflag, size = 0x4, scoped, tag = 'scoped memory for tpu_custom_call.1']
    #allocation7 [shape = 'u8[2048]{0}', space=vmem, size = 0x800, scoped, tag = 'output window, operand 0, single buffered']
    %7 = vsyncpa [#allocation3], 0
    %8 = vsyncpa [#allocation6], 0
    %9 = vsyncpa [#allocation4], 0
    // Predicated region
    $region2: #{tpu_custom_call.1} parent=1 // pred_check
      _
    $region3: #{tpu_custom_call.1} parent=1 // pred_check_branch
      %11 = sbr.rel (0) target = $region5
    $region4: #{tpu_custom_call.1} parent=1 // pred_region
      %13 = vsyncadd [#allocation3], 0
      %s15 = sshll.u32 %s0, 4
      %s16 = int_to_ptr.hbm [resolvable:$true] %s15
      %s17 = sshll.u32 [#allocation2], 4
      %s18 = int_to_ptr.vmem [resolvable:$true] %s17
      %20 = dma.hbm_to_vmem [thread:$0]  %s16, 64, %s18, [#allocation3]
    $region5: #{tpu_custom_call.1} parent=1 // pred_fallthru
      _
    // Predicated region
    $region6: #{tpu_custom_call.1} parent=1 // pred_check
      _
    $region7: #{tpu_custom_call.1} parent=1 // pred_check_branch
      %22 = sbr.rel (0) target = $region9
    $region8: #{tpu_custom_call.1} parent=1 // pred_region
      %24 = vsyncadd [#allocation6], 0
      %s25 = sshll.u32 %s1, 4
      %s26 = int_to_ptr.hbm [resolvable:$true] %s25
      %s27 = sshll.u32 [#allocation5], 4
      %s28 = int_to_ptr.vmem [resolvable:$true] %s27
      %33 = dma.hbm_to_vmem [thread:$0]  %s26, 2048, %s28, [#allocation6], 128, 128, 8
    $region9: #{tpu_custom_call.1} parent=1 // pred_fallthru
      _
    // Predicated region
    $region10: #{tpu_custom_call.1} parent=1 // pred_check
      _
    $region11: #{tpu_custom_call.1} parent=1 // pred_check_branch
      %35 = sbr.rel (0) target = $region13
    $region12: #{tpu_custom_call.1} parent=1 // pred_region
      %37 = dma.done [#allocation3], 64
    $region13: #{tpu_custom_call.1} parent=1 // pred_fallthru
      _
    // Predicated region
    $region14: #{tpu_custom_call.1} parent=1 // pred_check
      _
    $region15: #{tpu_custom_call.1} parent=1 // pred_check_branch
      %39 = sbr.rel (0) target = $region17
    $region16: #{tpu_custom_call.1} parent=1 // pred_region
      %41 = dma.done [#allocation6], 2048
    $region17: #{tpu_custom_call.1} parent=1 // pred_fallthru
      _
    %v42 = vld [vmem:[#allocation2] sm:$0xf]
    %v43 = vld [vmem:[#allocation5] sm:$0xff]
    %v44 = vld [vmem:[#allocation5 + $0x8] sm:$0xff]
    %v45 = vld [vmem:[#allocation5 + $0x10] sm:$0xff]
    %v46 = vld [vmem:[#allocation5 + $0x18] sm:$0xff]
    %v47 = vld [vmem:[#allocation5 + $0x20] sm:$0xff]
    %v48 = vld [vmem:[#allocation5 + $0x28] sm:$0xff]
    %v49 = vld [vmem:[#allocation5 + $0x30] sm:$0xff]
    %v50 = vld [vmem:[#allocation5 + $0x38] sm:$0xff]
    %v51 = vld [vmem:[#allocation5 + $0x40] sm:$0xff]
    %v52 = vld [vmem:[#allocation5 + $0x48] sm:$0xff]
    %v53 = vld [vmem:[#allocation5 + $0x50] sm:$0xff]
    %v54 = vld [vmem:[#allocation5 + $0x58] sm:$0xff]
    %v55 = vld [vmem:[#allocation5 + $0x60] sm:$0xff]
    %v56 = vld [vmem:[#allocation5 + $0x68] sm:$0xff]
    %v57 = vld [vmem:[#allocation5 + $0x70] sm:$0xff]
    %v58 = vld [vmem:[#allocation5 + $0x78] sm:$0xff]
    %59 = vmatpush.msra.mxu0 %v58
    %60 = vmatpush.msra.mxu0 %v57
    %61 = vmatpush.msra.mxu0 %v56
    %62 = vmatpush.msra.mxu0 %v55
    %63 = vmatpush.msra.mxu0 %v54
    %64 = vmatpush.msra.mxu0 %v53
    %65 = vmatpush.msra.mxu0 %v52
    %66 = vmatpush.msra.mxu0 %v51
    %67 = vmatpush.msra.mxu0 %v50
    %68 = vmatpush.msra.mxu0 %v49
    %69 = vmatpush.msra.mxu0 %v48
    %70 = vmatpush.msra.mxu0 %v47
    %71 = vmatpush.msra.mxu0 %v46
    %72 = vmatpush.msra.mxu0 %v45
    %73 = vmatpush.msra.mxu0 %v44
    %74 = vmatpush.msra.mxu0 %v43
    %75 = vmatmul.f32.gmra.mxu0 %v42
    %v76 = vpop.f32.mrf.mxu0
    %v77 = vadd.f32 0.0, %v76
    %78 = vdwg.mxu0
    %79 = vst [vmem:[#allocation7] sm:$0xf] %v77
    // Predicated region
    $region18: #{tpu_custom_call.1} parent=1 // pred_check
      _
    $region19: #{tpu_custom_call.1} parent=1 // pred_check_branch
      %81 = sbr.rel (0) target = $region21
    $region20: #{tpu_custom_call.1} parent=1 // pred_region
      %83 = vsyncadd [#allocation4], 0
      %s85 = sshll.u32 [#allocation7], 4
      %s86 = int_to_ptr.vmem [resolvable:$true] %s85
      %s87 = sshll.u32 %s2, 4
      %s88 = int_to_ptr.hbm [resolvable:$true] %s87
      %90 = dma.vmem_to_hbm [thread:$0]  %s86, 64, %s88, [#allocation4]
    $region21: #{tpu_custom_call.1} parent=1 // pred_fallthru
      _
    // Predicated region
    $region22: #{tpu_custom_call.1} parent=1 // pred_check
      _
    $region23: #{tpu_custom_call.1} parent=1 // pred_check_branch
      %92 = sbr.rel (0) target = $region25
    $region24: #{tpu_custom_call.1} parent=1 // pred_region
      %94 = dma.done [#allocation4], 64
    $region25: #{tpu_custom_call.1} parent=1 // pred_fallthru
      _
    %95 = vsyncpa [#allocation3], 1
    %96 = vsyncpa [#allocation6], 1
    %97 = vsyncpa [#allocation4], 1

</llo_original>
